<compile_context>
chip_gen: v6e
topology: v6e:2x2x1
jax: 0.10.0
libtpu: 0.0.40
codegen_flags: <defaults>
</compile_context>

<pallas_src>
import jax
import jax.numpy as jnp
from jax.experimental import pallas as pl
from jax.experimental.pallas import tpu as pltpu


def _round_up(x, m):
    return (x + m - 1) // m * m


def conv_stats_kernel(p_ref, w_ref, sum_ref, ssq_ref):
    # p_ref:   (KKCp, TM)  bf16 im2col patches (transposed: contraction x pixels)
    # w_ref:   (Cp8, KKCp) bf16 flattened weights (resident every step)
    # sum_ref: (1, Cp8, 1) f32 per-tile per-channel sum
    # ssq_ref: (1, Cp8, 1) f32 per-tile per-channel sum of squares
    conv = jnp.dot(w_ref[...], p_ref[...], preferred_element_type=jnp.float32)  # (Cp8, TM)
    sum_ref[...] = jnp.sum(conv, axis=1, keepdims=True)[None]
    ssq_ref[...] = jnp.sum(conv * conv, axis=1, keepdims=True)[None]


def conv_bn_hswish_kernel(p_ref, w_ref, scale_ref, shift_ref, o_ref):
    # Recompute conv on the MXU, apply folded BN (y = conv*scale + shift), then Hardswish.
    conv = jnp.dot(w_ref[...], p_ref[...], preferred_element_type=jnp.float32)  # (Cp8, TM)
    y = conv * scale_ref[...] + shift_ref[...]
    o_ref[...] = (y * jnp.clip(y + 3.0, 0.0, 6.0) * (1.0 / 6.0)).astype(o_ref.dtype)


def stem_conv(x_nchw, weight_oihw, gamma, beta, *, stride, eps=1e-5):
    """x_nchw: (N, Cin, H, W) f32; weight_oihw: (Cout, Cin, K, K) f32."""
    N, Cin, H, W = x_nchw.shape
    Cout, Cin_w, K, _ = weight_oihw.shape
    assert Cin_w == Cin
    pad = (K - 1) // 2
    OH = (H + 2 * pad - K) // stride + 1
    OW = (W + 2 * pad - K) // stride + 1
    M = N * OH * OW
    KKC = K * K * Cin

    # Minimal padding: contraction to bf16 sublane multiple, channels to f32 sublane multiple.
    KKCp = _round_up(KKC, 16)
    Cp8 = _round_up(Cout, 8)

    # M is the lane (minor) dim of every tile -> multiples of 128; big TM amortizes
    # per-grid-step overhead (both passes are HBM-bound).
    TM = min(4096, _round_up(M, 128))
    n_tiles = _round_up(M, TM) // TM
    if n_tiles < 2 and M > 128:  # give both v7x TensorCores work when M allows
        TM = _round_up((M + 1) // 2, 128)
        n_tiles = _round_up(M, TM) // TM
    Mp = n_tiles * TM

    # ---- glue: NCHW -> NHWC (bf16), zero-pad, im2col (layout only) ----
    # TODO(synk): fuse this into pass 1 with a halo-tiled NHWC BlockSpec.
    x = jnp.transpose(x_nchw, (0, 2, 3, 1)).astype(jnp.bfloat16)          # (N, H, W, Cin)
    x = jnp.pad(x, ((0, 0), (pad, pad), (pad, pad), (0, 0)))
    taps = []
    for kh in range(K):
        for kw in range(K):
            taps.append(x[:, kh:kh + (OH - 1) * stride + 1:stride,
                             kw:kw + (OW - 1) * stride + 1:stride, :])    # (N, OH, OW, Cin)
    patches = jnp.stack(taps, axis=3).reshape(M, KKC)                     # bf16 (M, K*K*Cin)
    patches_t = jnp.pad(patches.T, ((0, KKCp - KKC), (0, Mp - M)))        # bf16 (KKCp, Mp)

    # weight (Cout, Cin, K, K) -> (Cout, K, K, Cin) -> (Cout, KKC), matching patch order.
    w_flat = jnp.transpose(weight_oihw, (0, 2, 3, 1)).reshape(Cout, KKC)
    w_flat = jnp.pad(w_flat, ((0, Cp8 - Cout), (0, KKCp - KKC))).astype(jnp.bfloat16)

    gamma_p = jnp.pad(gamma.astype(jnp.float32), (0, Cp8 - Cout))
    beta_p = jnp.pad(beta.astype(jnp.float32), (0, Cp8 - Cout))

    # VMEM budgets from the actual tiles (double-buffered inputs/outputs + f32 conv tile),
    # capped at 32 MiB -- safe on v7x's 64 MiB physical VMEM, fine on v5e/v6e.
    patch_tile = KKCp * TM * 2
    w_bytes = Cp8 * KKCp * 2
    conv_tile = Cp8 * TM * 4
    out_tile = Cp8 * TM * 4
    vmem1 = 2 * patch_tile + 2 * w_bytes + conv_tile + 8 * Cp8 * 4
    vmem2 = 2 * patch_tile + 2 * w_bytes + conv_tile + 2 * out_tile + 8 * Cp8 * 4

    def _limit(need):
        return int(min(max(2 * need, 16 << 20), 32 << 20))

    cp1 = pltpu.CompilerParams(dimension_semantics=("parallel",),
                               vmem_limit_bytes=_limit(vmem1))
    cp2 = pltpu.CompilerParams(dimension_semantics=("parallel",),
                               vmem_limit_bytes=_limit(vmem2))

    # ---- pass 1: conv (bf16 MXU, f32 acc) -> per-tile partial BN stats only ----
    part_sum, part_ssq = pl.pallas_call(
        conv_stats_kernel,
        out_shape=(jax.ShapeDtypeStruct((n_tiles, Cp8, 1), jnp.float32),
                   jax.ShapeDtypeStruct((n_tiles, Cp8, 1), jnp.float32)),
        grid=(n_tiles,),
        in_specs=[
            pl.BlockSpec((KKCp, TM), lambda i: (0, i)),
            pl.BlockSpec((Cp8, KKCp), lambda i: (0, 0)),
        ],
        out_specs=(
            pl.BlockSpec((1, Cp8, 1), lambda i: (i, 0, 0)),
            pl.BlockSpec((1, Cp8, 1), lambda i: (i, 0, 0)),
        ),
        compiler_params=cp1,
    )(patches_t, w_flat)

    # ---- tiny JAX glue: reduce partial stats, fold BN into scale / shift ----
    # Padded M columns of patches_t are zero -> contribute zero; divide by true M.
    total_sum = jnp.sum(part_sum[:, :, 0], axis=0)                        # (Cp8,)
    total_ssq = jnp.sum(part_ssq[:, :, 0], axis=0)                        # (Cp8,)
    mean = total_sum / M
    # NOTE: E[x^2] - mean^2 in f32; fine at stem scales -- switch to a per-tile
    # Welford/Chan combine if |mean|/sigma grows large at production shapes.
    var = jnp.maximum(total_ssq / M - mean * mean, 0.0)
    scale = gamma_p * jax.lax.rsqrt(var + eps)
    shift = beta_p - mean * scale

    # ---- pass 2: recompute conv, scale/shift, Hardswish -> (Cout, M) lane-dense slab ----
    out_full = pl.pallas_call(
        conv_bn_hswish_kernel,
        out_shape=jax.ShapeDtypeStruct((Cp8, Mp), jnp.float32),
        grid=(n_tiles,),
        in_specs=[
            pl.BlockSpec((KKCp, TM), lambda i: (0, i)),
            pl.BlockSpec((Cp8, KKCp), lambda i: (0, 0)),
            pl.BlockSpec((Cp8, 1), lambda i: (0, 0)),
            pl.BlockSpec((Cp8, 1), lambda i: (0, 0)),
        ],
        out_specs=pl.BlockSpec((Cp8, TM), lambda i: (0, i)),
        compiler_params=cp2,
    )(patches_t, w_flat, scale.reshape(Cp8, 1), shift.reshape(Cp8, 1))

    out = out_full[:Cout, :M].reshape(Cout, N, OH, OW)
    return jnp.transpose(out, (1, 0, 2, 3))                               # (N, Cout, OH, OW)


def _reference(x, w, gamma, beta, stride, eps=1e-5):
    pad = (w.shape[-1] - 1) // 2
    conv = jax.lax.conv_general_dilated(
        x, w, (stride, stride), ((pad, pad), (pad, pad)),
        dimension_numbers=("NCHW", "OIHW", "NCHW"))
    mean = conv.mean(axis=(0, 2, 3), keepdims=True)
    var = jnp.square(conv - mean).mean(axis=(0, 2, 3), keepdims=True)
    y = (conv - mean) * jax.lax.rsqrt(var + eps)
    y = y * gamma.reshape(1, -1, 1, 1) + beta.reshape(1, -1, 1, 1)
    return y * jnp.clip(y + 3.0, 0.0, 6.0) / 6.0


if __name__ == "__main__":
    # StemConv(in_channels=4, out_channels=16, kernel_size=3, stride=2)
    N, Cin, H, W = 2, 4, 16, 16
    Cout, K, stride = 16, 3, 2

    key = jax.random.PRNGKey(0)
    kx, kw, kg, kb = jax.random.split(key, 4)
    x = jax.random.normal(kx, (N, Cin, H, W), dtype=jnp.float32)
    weight = jax.random.normal(kw, (Cout, Cin, K, K), dtype=jnp.float32) * 0.1
    gamma = 1.0 + 0.1 * jax.random.normal(kg, (Cout,), dtype=jnp.float32)
    beta = 0.1 * jax.random.normal(kb, (Cout,), dtype=jnp.float32)

    out = stem_conv(x, weight, gamma, beta, stride=stride)
    out = jax.block_until_ready(out)

    ref = _reference(x, weight, gamma, beta, stride)
    assert out.shape == ref.shape == (N, Cout, H // stride, W // stride)
    # bf16 MXU inputs (f32 accumulate) vs pure-f32 reference: slightly loosened tolerance.
    assert jnp.allclose(out, ref, rtol=3e-2, atol=3e-2), "mismatch vs. JAX reference"

    print("KERNEL_OK")
</pallas_src>

<mosaic_0001>
module attributes {stable_mosaic.version = 11 : i64} {
  func.func @conv_stats_kernel(%arg0: i32, %arg1: memref<48x128xbf16, #tpu.memory_space<vmem>>, %arg2: memref<16x48xbf16, #tpu.memory_space<vmem>>, %arg3: memref<1x16x1xf32, #tpu.memory_space<vmem>>, %arg4: memref<1x16x1xf32, #tpu.memory_space<vmem>>) attributes {dimension_semantics = [#tpu.dimension_semantics<parallel>], iteration_bounds = array<i64: 1>, scalar_prefetch = 0 : i64, scratch_operands = 0 : i64, tpu.core_type = #tpu.core_type<tc>, window_params = [{transform_indices = @transform_0, window_bounds = array<i64: 48, 128>}, {pipeline_mode = #tpu.pipeline_mode<synchronous>, transform_indices = @transform_1, window_bounds = array<i64: 16, 48>}, {transform_indices = @transform_2, window_bounds = array<i64: 1, 16, 1>}, {transform_indices = @transform_3, window_bounds = array<i64: 1, 16, 1>}]} {
    %c0 = arith.constant 0 : index
    %c0_0 = arith.constant 0 : index
    %0 = vector.load %arg2[%c0, %c0_0] : memref<16x48xbf16, #tpu.memory_space<vmem>>, vector<16x48xbf16>
    %c0_1 = arith.constant 0 : index
    %c0_2 = arith.constant 0 : index
    %1 = vector.load %arg1[%c0_1, %c0_2] : memref<48x128xbf16, #tpu.memory_space<vmem>>, vector<48x128xbf16>
    %cst = arith.constant dense<0.000000e+00> : vector<16x128xf32>
    %2 = tpu.matmul %0, %1, %cst {dimension_numbers = #tpu.dot_dimension_numbers<[1], [0], [0], [1], [0, 0, 1, 1], [], []>} : vector<16x48xbf16>, vector<48x128xbf16>, vector<16x128xf32> -> vector<16x128xf32>
    %cst_3 = arith.constant dense<0.000000e+00> : vector<16xf32>
    %3 = vector.multi_reduction <add>, %2, %cst_3 [1] : vector<16x128xf32> to vector<16xf32>
    %4 = vector.shape_cast %3 : vector<16xf32> to vector<16x1xf32>
    %5 = vector.shape_cast %4 : vector<16x1xf32> to vector<1x16x1xf32>
    %c0_4 = arith.constant 0 : index
    %c0_5 = arith.constant 0 : index
    %c0_6 = arith.constant 0 : index
    %6 = vector.load %arg3[%c0_4, %c0_5, %c0_6] : memref<1x16x1xf32, #tpu.memory_space<vmem>>, vector<1x16x1xf32>
    tpu.vector_store %arg3[%c0_4, %c0_5, %c0_6], %5 {strides = array<i32>} : memref<1x16x1xf32, #tpu.memory_space<vmem>>, vector<1x16x1xf32>,
    %7 = arith.mulf %2, %2 : vector<16x128xf32>
    %cst_7 = arith.constant dense<0.000000e+00> : vector<16xf32>
    %8 = vector.multi_reduction <add>, %7, %cst_7 [1] : vector<16x128xf32> to vector<16xf32>
    %9 = vector.shape_cast %8 : vector<16xf32> to vector<16x1xf32>
    %10 = vector.shape_cast %9 : vector<16x1xf32> to vector<1x16x1xf32>
    %c0_8 = arith.constant 0 : index
    %c0_9 = arith.constant 0 : index
    %c0_10 = arith.constant 0 : index
    %11 = vector.load %arg4[%c0_8, %c0_9, %c0_10] : memref<1x16x1xf32, #tpu.memory_space<vmem>>, vector<1x16x1xf32>
    tpu.vector_store %arg4[%c0_8, %c0_9, %c0_10], %10 {strides = array<i32>} : memref<1x16x1xf32, #tpu.memory_space<vmem>>, vector<1x16x1xf32>,
    return
  }
  func.func @transform_0(%arg0: i32) -> (i32, i32) {
    %c0_i32 = arith.constant 0 : i32
    %c0_i32_0 = arith.constant 0 : i32
    return %c0_i32, %arg0 : i32, i32
  }
  func.func @transform_1(%arg0: i32) -> (i32, i32) {
    %c0_i32 = arith.constant 0 : i32
    %c0_i32_0 = arith.constant 0 : i32
    %c0_i32_1 = arith.constant 0 : i32
    return %c0_i32, %c0_i32_0 : i32, i32
  }
  func.func @transform_2(%arg0: i32) -> (i32, i32, i32) {
    %c0_i32 = arith.constant 0 : i32
    %c0_i32_0 = arith.constant 0 : i32
    %c0_i32_1 = arith.constant 0 : i32
    return %arg0, %c0_i32, %c0_i32_0 : i32, i32, i32
  }
  func.func @transform_3(%arg0: i32) -> (i32, i32, i32) {
    %c0_i32 = arith.constant 0 : i32
    %c0_i32_0 = arith.constant 0 : i32
    %c0_i32_1 = arith.constant 0 : i32
    return %arg0, %c0_i32, %c0_i32_0 : i32, i32, i32
  }
}

</mosaic_0001>

<llo_original>
// kernel: tpu_custom_call.1
$region0: #{tpu_custom_call.1}
  #allocation0 [shape = 'u32[]', space=smem, size = 0x4, offset = 0x4, fixed_abs, tag = 'smem constant byte address 0x4 - core index']
  #allocation1 [shape = 'u32[144,128]{1,0:T(1,128)}', space=vmem, size = 0x12000, scoped, tag = 'internal scratch']
  %s0 = inlined_call_operand.hbm [shape: bf16[48,128], index: 0, kind: input, shape index: {}]
  %s1 = inlined_call_operand.hbm [shape: bf16[16,48], index: 1, kind: input, shape index: {}]
  %s2 = inlined_call_operand.vmem [shape: f32[1,16,1], index: 2, kind: output, shape index: {0}]
  %s3 = inlined_call_operand.vmem [shape: f32[1,16,1], index: 3, kind: output, shape index: {1}]
  %4 = xla_tuple %s2, %s3
  %s5 = sld [smem:[#allocation0]]
  $region34: #{tpu_custom_call.1} parent=0
    _
  %s7 = ssub.s32 1, %s5
  %s8 = scalar_select 0, %s7, %s5
  $region1: #{tpu_custom_call.1} parent=0
    #allocation2 [shape = 'u8[12288]{0}', space=vmem, size = 0x3000, scoped, tag = 'input window, operand 0, single buffered']
    #allocation3 [shape = 's32[1]{0}', space=sflag, size = 0x4, scoped, tag = 'scoped memory for tpu_custom_call.1']
    #allocation4 [shape = 'u8[4096]{0}', space=vmem, size = 0x1000, scoped, tag = 'input window, operand 1, single buffered']
    #allocation5 [shape = 's32[1]{0}', space=sflag, size = 0x4, scoped, tag = 'scoped memory for tpu_custom_call.1']
    %9 = vsyncpa [#allocation3], 0
    %10 = vsyncpa [#allocation5], 0
    // Predicated region
    $region2: #{tpu_custom_call.1} parent=1 // pred_check
      _
    $region3: #{tpu_custom_call.1} parent=1 // pred_check_branch
      %12 = sbr.rel (0) target = $region5
    $region4: #{tpu_custom_call.1} parent=1 // pred_region
      %s14 = ssub.s32 384, 384
      %15 = vsyncadd [#allocation3], %s14
      %s16 = sshll.u32 [#allocation2], 4
      %s17 = int_to_ptr.vmem [resolvable:$true] %s16
      %22 = dma.hbm_to_vmem [thread:$0]  %s0, 384, %s17, [#allocation3], 64, 64, 4
    $region5: #{tpu_custom_call.1} parent=1 // pred_fallthru
      _
    // Predicated region
    $region6: #{tpu_custom_call.1} parent=1 // pred_check
      _
    $region7: #{tpu_custom_call.1} parent=1 // pred_check_branch
      %24 = sbr.rel (0) target = $region9
    $region8: #{tpu_custom_call.1} parent=1 // pred_region
      %s26 = ssub.s32 128, 128
      %27 = vsyncadd [#allocation5], %s26
      %s28 = sshll.u32 [#allocation4], 4
      %s29 = int_to_ptr.vmem [resolvable:$true] %s28
      %34 = dma.hbm_to_vmem [thread:$0]  %s1, 128, %s29, [#allocation5], 64, 64, 4
    $region9: #{tpu_custom_call.1} parent=1 // pred_fallthru
      _
    // Predicated region
    $region10: #{tpu_custom_call.1} parent=1 // pred_check
      _
    $region11: #{tpu_custom_call.1} parent=1 // pred_check_branch
      %36 = sbr.rel (0) target = $region13
    $region12: #{tpu_custom_call.1} parent=1 // pred_region
      %37 = dma.done [#allocation3], 384
    $region13: #{tpu_custom_call.1} parent=1 // pred_fallthru
      _
    // Predicated region
    $region14: #{tpu_custom_call.1} parent=1 // pred_check
      _
    $region15: #{tpu_custom_call.1} parent=1 // pred_check_branch
      %39 = sbr.rel (0) target = $region17
    $region16: #{tpu_custom_call.1} parent=1 // pred_region
      %40 = dma.done [#allocation5], 128
    $region17: #{tpu_custom_call.1} parent=1 // pred_fallthru
      _
    %v42 = vld [vmem:[#allocation4] sm:$0xf]
    %v43 = vld [vmem:[#allocation4 + $0x4] sm:$0xf]
    %v44 = vld [vmem:[#allocation2] sm:$0xf]
    %v45 = vld [vmem:[#allocation2 + $0x4] sm:$0xf]
    %v46 = vld [vmem:[#allocation2 + $0x8] sm:$0xf]
    %v47 = vld [vmem:[#allocation2 + $0xc] sm:$0xf]
    %v48 = vld [vmem:[#allocation2 + $0x10] sm:$0xf]
    %v49 = vld [vmem:[#allocation2 + $0x14] sm:$0xf]
    %v52 = vunpack.c.l.b16 %v42
    %v53 = vunpack.c.l.b16 %v43
    %v54 = vpack.c.b16 %v53, %v52
    %v61 = vunpack.c.l.b16 %v44
    %v62 = vunpack.c.l.b16 %v45
    %v63 = vunpack.c.l.b16 %v46
    %v64 = vunpack.c.l.b16 %v47
    %v65 = vunpack.c.l.b16 %v48
    %v66 = vunpack.c.l.b16 %v49
    %v67 = vpack.c.b16 %v62, %v61
    %v68 = vpack.c.b16 %v64, %v63
    %v69 = vpack.c.b16 %v66, %v65
    %vm73 = vcmask 392192
    %v75 = vsel %vm73, %v54, 0
    %77 = vmatprep.subr.bf16.mxu0 0
    %78 = vmatpush1.bf16.msra.mxu0 0
    %79 = vmatprep.subr.bf16.mxu0 0
    %80 = vmatpush1.bf16.msra.mxu0 0
    %81 = vmatprep.subr.bf16.mxu0 0
    %82 = vmatpush1.bf16.msra.mxu0 0
    %83 = vmatprep.subr.bf16.mxu0 0
    %84 = vmatpush1.bf16.msra.mxu0 0
    %85 = vmatprep.subr.bf16.mxu0 0
    %86 = vmatpush1.bf16.msra.mxu0 0
    %87 = vmatprep.subr.bf16.mxu0 0
    %88 = vmatpush1.bf16.msra.mxu0 %v69
    %89 = vmatprep.subr.bf16.mxu0 0
    %90 = vmatpush1.bf16.msra.mxu0 %v68
    %91 = vmatprep.subr.bf16.mxu0 0
    %92 = vmatpush1.bf16.msra.mxu0 %v67
    %93 = vmatprep.subr.bf16.mxu0 0
    %94 = vmatpush2.bf16.msra.mxu0 0
    %95 = vmatprep.subr.bf16.mxu0 0
    %96 = vmatpush2.bf16.msra.mxu0 0
    %97 = vmatprep.subr.bf16.mxu0 0
    %98 = vmatpush2.bf16.msra.mxu0 0
    %99 = vmatprep.subr.bf16.mxu0 0
    %100 = vmatpush2.bf16.msra.mxu0 0
    %101 = vmatprep.subr.bf16.mxu0 0
    %102 = vmatpush2.bf16.msra.mxu0 0
    %103 = vmatprep.subr.bf16.mxu0 0
    %104 = vmatpush2.bf16.msra.mxu0 0
    %105 = vmatprep.subr.bf16.mxu0 0
    %106 = vmatpush2.bf16.msra.mxu0 0
    %107 = vmatprep.subr.bf16.mxu0 0
    %108 = vmatpush2.bf16.msra.mxu0 0
    %109 = vmatprep.mubr.bf16.mxu0 0
    %110 = vmatmul.mubr.bf16.gmra.mxu0 %v75
    %v111 = vpop.f32.mrf.mxu0
    %v112 = vadd.f32 0.0, %v111
    %v113 = vpop.f32.mrf.mxu0
    %v114 = vpop.f32.mrf.mxu0
    %v115 = vadd.f32 0.0, %v114
    %v116 = vpop.f32.mrf.mxu0
    %117 = vdwg.mxu0
    %118 = vadd.xlane.f32.xlu0 %v112
    %v119 = vpop.xlane.xlu0 %118
    %120 = vadd.xlane.f32.xlu0 %v115
    %v121 = vpop.xlane.xlu0 %120
    %vm122 = vcmask 7168
    %123 = vst.msk [vmem:[%s2] sm:$0xff] %vm122, %v119
    %124 = vst.msk [vmem:[%s2 + $0x8] sm:$0xff] %vm122, %v121
    %v125 = vmul.f32 %v112, %v112
    %v126 = vmul.f32 %v115, %v115
    %127 = vadd.xlane.f32.xlu0 %v125
    %v128 = vpop.xlane.xlu0 %127
    %129 = vadd.xlane.f32.xlu0 %v126
    %v130 = vpop.xlane.xlu0 %129
    %131 = vst.msk [vmem:[%s3] sm:$0xff] %vm122, %v128
    %132 = vst.msk [vmem:[%s3 + $0x8] sm:$0xff] %vm122, %v130
    // Predicated region
    $region18: #{tpu_custom_call.1} parent=1 // pred_check
      _
    $region19: #{tpu_custom_call.1} parent=1 // pred_check_branch
      %134 = sbr.rel (0) target = $region21
    $region20: #{tpu_custom_call.1} parent=1 // pred_region
      _
    $region21: #{tpu_custom_call.1} parent=1 // pred_fallthru
      _
    // Predicated region
    $region22: #{tpu_custom_call.1} parent=1 // pred_check
      _
    $region23: #{tpu_custom_call.1} parent=1 // pred_check_branch
      %136 = sbr.rel (0) target = $region25
    $region24: #{tpu_custom_call.1} parent=1 // pred_region
      _
    $region25: #{tpu_custom_call.1} parent=1 // pred_fallthru
      _
    // Predicated region
    $region26: #{tpu_custom_call.1} parent=1 // pred_check
      _
    $region27: #{tpu_custom_call.1} parent=1 // pred_check_branch
      %138 = sbr.rel (0) target = $region29
    $region28: #{tpu_custom_call.1} parent=1 // pred_region
      _
    $region29: #{tpu_custom_call.1} parent=1 // pred_fallthru
      _
    // Predicated region
    $region30: #{tpu_custom_call.1} parent=1 // pred_check
      _
    $region31: #{tpu_custom_call.1} parent=1 // pred_check_branch
      %140 = sbr.rel (0) target = $region33
    $region32: #{tpu_custom_call.1} parent=1 // pred_region
      _
    $region33: #{tpu_custom_call.1} parent=1 // pred_fallthru
      _
    %141 = vsyncpa [#allocation3], 1
    %142 = vsyncpa [#allocation5], 1

</llo_original>
